<compile_context>
chip_gen: v7x
topology: tpu7x:2x2x1
jax: 0.10.0
libtpu: 0.0.40
codegen_flags: <defaults>
</compile_context>

<pallas_src>
import numpy as np

import jax
import jax.numpy as jnp
from jax.experimental import pallas as pl
from jax.experimental.pallas import tpu as pltpu


def _memorization_kernel(x_ref, logits_ref, out_ref):
    # x_ref:      (block_rows, 1)            per-example scalars (lane broadcast)
    # logits_ref: (block_rows, block_cols)   lane-dense tile
    # out_ref:    (block_rows, block_cols)
    out_ref[...] = logits_ref[...] * x_ref[...]


def _round_up(x, m):
    return ((x + m - 1) // m) * m


def _vmem_capacity_bytes():
    try:
        return int(pltpu.get_tpu_info().vmem_capacity_bytes)
    except Exception:
        return 64 << 20  # conservative fallback (v7x per-TensorCore)


def memorization_forward(x, logits, *, max_block_rows=128, validate=False):
    """x: (N,) of ones; logits: (N, S, V) parameter. Returns x[n]*logits[n,s,v]."""
    n, s, v = logits.shape
    if x.shape != (n,):
        raise ValueError(f"Invalid input shape: {x.shape}, expected {(n,)}")
    if validate:
        # Debug-only mirror of the PyTorch module's value assertion; never
        # legal under jit (would force a host sync on a tracer).
        if isinstance(x, jax.core.Tracer):
            raise ValueError("validate=True cannot be used under jit/trace")
        if not np.all(np.asarray(x) == 1):
            raise ValueError("All values of x should be 1")

    cols = s * v
    dtype_size = jnp.dtype(logits.dtype).itemsize
    logits2d = logits.reshape(n, cols)          # lane-dense 2-D view
    x2d = x.reshape(n, 1).astype(logits.dtype)  # per-row scalar column

    # ---- Generation-aware block sizing (fixed shape; cdiv grid pads edges) ----
    vmem_cap = _vmem_capacity_bytes()
    # ~8 MiB blocks when VMEM is plentiful (v5e/v6e: 128 MiB physical),
    # ~4 MiB blocks on 64-MiB-VMEM chips (v7x). Double-buffered in+out => 4x.
    per_block_budget = (8 << 20) if vmem_cap >= (96 << 20) else (4 << 20)

    # Sublane (row) dim: multiple of 8; never bigger than needed for this N.
    block_rows = min(max_block_rows, _round_up(n, 8))
    # Lane (col) dim: as wide as the per-block budget allows, multiple of 128,
    # never bigger than needed for this S*V.
    cols_cap = max(512, (per_block_budget // (block_rows * dtype_size)) // 128 * 128)
    block_cols = min(cols_cap, _round_up(cols, 128))

    num_row_blocks = pl.cdiv(n, block_rows)
    num_col_blocks = pl.cdiv(cols, block_cols)

    # ---- Grid ordering ----
    # Rows outermost when they have >1 blocks (x block index constant across
    # the inner column loop => no redundant x DMAs). When N fits one row
    # block, put the column axis first so the leading parallel axis has
    # extent > 1 and shards across v7x's two TensorCores.
    rows_first = (num_row_blocks > 1) or (num_col_blocks == 1)
    if rows_first:
        grid = (num_row_blocks, num_col_blocks)
        x_map = lambda i, j: (i, 0)
        tile_map = lambda i, j: (i, j)
    else:
        grid = (num_col_blocks, num_row_blocks)
        x_map = lambda j, i: (i, 0)
        tile_map = lambda j, i: (i, j)

    # Keep the compiler's scoped-VMEM budget comfortably above the
    # double-buffered footprint, but leave headroom on v7x (64 MiB physical).
    vmem_limit = min(int(0.75 * vmem_cap), 96 << 20)

    cost = pl.CostEstimate(
        flops=n * cols,
        transcendentals=0,
        bytes_accessed=2 * n * cols * dtype_size + n * dtype_size,
    )

    out2d = pl.pallas_call(
        _memorization_kernel,
        out_shape=jax.ShapeDtypeStruct((n, cols), logits.dtype),
        grid=grid,
        in_specs=[
            # Per-example scalars for this row-block (broadcast inside kernel).
            pl.BlockSpec((block_rows, 1), x_map),
            # Lane-dense logits tile.
            pl.BlockSpec((block_rows, block_cols), tile_map),
        ],
        out_specs=pl.BlockSpec((block_rows, block_cols), tile_map),
        compiler_params=pltpu.CompilerParams(
            dimension_semantics=("parallel", "parallel"),
            vmem_limit_bytes=vmem_limit,
        ),
        cost_estimate=cost,
    )(x2d, logits2d)

    return out2d.reshape(n, s, v)


if __name__ == "__main__":
    # Small shapes consistent with the module's constructor.
    batch_size, seq_len, vocab_size = 2, 8, 32

    key = jax.random.PRNGKey(0)
    # Deterministic parameter init (stands in for torch.randn in __init__).
    logits = jax.random.normal(
        key, (batch_size, seq_len, vocab_size), dtype=jnp.float32
    )
    x = jnp.ones((batch_size,), dtype=jnp.float32)

    # One-time validation outside the hot path (mirrors the module's check).
    assert bool(jnp.all(x == 1)), "All values of x should be 1"

    fwd = jax.jit(memorization_forward)
    out = jax.block_until_ready(fwd(x, logits))

    assert out.shape == (batch_size, seq_len, vocab_size), out.shape
    # Since x is all-ones, forward must reproduce the logits exactly.
    np.testing.assert_allclose(np.asarray(out), np.asarray(logits), rtol=0, atol=0)

    print("KERNEL_OK")
</pallas_src>

<mosaic_0001>
module attributes {stable_mosaic.version = 11 : i64} {
  func.func @_memorization_kernel(%arg0: i32, %arg1: i32, %arg2: memref<8x1xf32, #tpu.memory_space<vmem>>, %arg3: memref<8x256xf32, #tpu.memory_space<vmem>>, %arg4: memref<8x256xf32, #tpu.memory_space<vmem>>) attributes {dimension_semantics = [#tpu.dimension_semantics<parallel>, #tpu.dimension_semantics<parallel>], iteration_bounds = array<i64: 1, 1>, scalar_prefetch = 0 : i64, scratch_operands = 0 : i64, tpu.core_type = #tpu.core_type<tc>, window_params = [{transform_indices = @transform_0, window_bounds = array<i64: 8, 1>}, {transform_indices = @transform_1, window_bounds = array<i64: 8, 256>}, {transform_indices = @transform_2, window_bounds = array<i64: 8, 256>}]} {
    %c0 = arith.constant 0 : index
    %c0_0 = arith.constant 0 : index
    %0 = vector.load %arg3[%c0, %c0_0] : memref<8x256xf32, #tpu.memory_space<vmem>>, vector<8x256xf32>
    %c0_1 = arith.constant 0 : index
    %c0_2 = arith.constant 0 : index
    %1 = vector.load %arg2[%c0_1, %c0_2] : memref<8x1xf32, #tpu.memory_space<vmem>>, vector<8x1xf32>
    %2 = vector.broadcast %1 : vector<8x1xf32> to vector<8x256xf32>
    %3 = arith.mulf %0, %2 : vector<8x256xf32>
    %c0_3 = arith.constant 0 : index
    %c0_4 = arith.constant 0 : index
    %4 = vector.load %arg4[%c0_3, %c0_4] : memref<8x256xf32, #tpu.memory_space<vmem>>, vector<8x256xf32>
    tpu.vector_store %arg4[%c0_3, %c0_4], %3 {strides = array<i32>} : memref<8x256xf32, #tpu.memory_space<vmem>>, vector<8x256xf32>,
    return
  }
  func.func @transform_0(%arg0: i32, %arg1: i32) -> (i32, i32) {
    %c0_i32 = arith.constant 0 : i32
    %c0_i32_0 = arith.constant 0 : i32
    return %arg0, %c0_i32 : i32, i32
  }
  func.func @transform_1(%arg0: i32, %arg1: i32) -> (i32, i32) {
    %c0_i32 = arith.constant 0 : i32
    return %arg0, %arg1 : i32, i32
  }
  func.func @transform_2(%arg0: i32, %arg1: i32) -> (i32, i32) {
    %c0_i32 = arith.constant 0 : i32
    return %arg0, %arg1 : i32, i32
  }
}

</mosaic_0001>

<llo_original>
// kernel: memorization_forward.1
$region0: #{memorization_forward.1}
  #allocation0 [shape = 'u32[]', space=smem, size = 0x4, offset = 0x4, fixed_abs, tag = 'smem constant byte address 0x4 - core index']
  #allocation1 [shape = 'u32[144,128]{1,0:T(1,128)}', space=vmem, size = 0x12000, scoped, tag = 'internal scratch']
  %s0 = inlined_call_operand.vmem [shape: f32[2,1], index: 0, kind: input, shape index: {}]
  %s1 = inlined_call_operand.vmem [shape: f32[2,256], index: 1, kind: input, shape index: {}]
  %s2 = inlined_call_operand.vmem [shape: f32[2,256], index: 2, kind: output, shape index: {}]
  %s3 = sld [smem:[#allocation0]]
  $region48: #{memorization_forward.1} parent=0
    _
  %s5 = ssub.s32 1, %s3
  %s6 = scalar_select 0, %s5, %s3
  $region1: #{memorization_forward.1} parent=0
    #allocation2 [shape = 'u8[8192]{0}', space=vmem, size = 0x2000, scoped, tag = 'output window, operand 0, single buffered']
    // Predicated region
    $region2: #{memorization_forward.1} parent=1 // pred_check
      _
    $region3: #{memorization_forward.1} parent=1 // pred_check_branch
      %8 = sbr.rel (0) target = $region5
    $region4: #{memorization_forward.1} parent=1 // pred_region
      _
    $region5: #{memorization_forward.1} parent=1 // pred_fallthru
      _
    // Predicated region
    $region6: #{memorization_forward.1} parent=1 // pred_check
      _
    $region7: #{memorization_forward.1} parent=1 // pred_check_branch
      %10 = sbr.rel (0) target = $region9
    $region8: #{memorization_forward.1} parent=1 // pred_region
      _
    $region9: #{memorization_forward.1} parent=1 // pred_fallthru
      _
    %v11 = vld [vmem:[%s1] sm:$0xf]
    %v12 = vld [vmem:[%s1 + $0x4] sm:$0xf]
    %v13 = vld [vmem:[%s1 + $0x8] sm:$0xf]
    %v14 = vld [vmem:[%s1 + $0xc] sm:$0xf]
    %v15 = vld [vmem:[%s0] sm:$0xff]
    %17 = vset.pattern.permute.xlu0 0
    %18 = vperm.xlu0 %17, %v15
    %v19 = vpop.permute.xlu0 %18
    %v21 = vunpack.c.l.s4 269488144
    %v22 = vunpack.c.0.s8 %v21
    %v23 = vlaneseq
    %v24 = vshrl.u32 %v23, 7
    %v25 = vsub.s32 %v22, %v24
    %v26 = vrot.slane %v19, %v25
    %v28 = vunpack.c.l.s4 842150450
    %v29 = vunpack.c.0.s8 %v28
    %v30 = vlaneseq
    %v31 = vshrl.u32 %v30, 7
    %v32 = vsub.s32 %v29, %v31
    %v33 = vrot.slane %v19, %v32
    %v35 = vunpack.c.l.s4 1414812756
    %v36 = vunpack.c.0.s8 %v35
    %v37 = vlaneseq
    %v38 = vshrl.u32 %v37, 7
    %v39 = vsub.s32 %v36, %v38
    %v40 = vrot.slane %v19, %v39
    %v42 = vunpack.c.l.s4 1987475062
    %v43 = vunpack.c.0.s8 %v42
    %v44 = vlaneseq
    %v45 = vshrl.u32 %v44, 7
    %v46 = vsub.s32 %v43, %v45
    %v47 = vrot.slane %v19, %v46
    %v52 = vmul.f32 %v11, %v26
    %v53 = vmul.f32 %v12, %v33
    %v54 = vmul.f32 %v13, %v40
    %v55 = vmul.f32 %v14, %v47
    %56 = vst [vmem:[#allocation2] sm:$0xf] %v52
    %57 = vst [vmem:[#allocation2 + $0x4] sm:$0xf] %v53
    %58 = vst [vmem:[#allocation2 + $0x8] sm:$0xf] %v54
    %59 = vst [vmem:[#allocation2 + $0xc] sm:$0xf] %v55
    // Predicated region
    $region10: #{memorization_forward.1} parent=1 // pred_check
      _
    $region11: #{memorization_forward.1} parent=1 // pred_check_branch
      %61 = sbr.rel (0) target = $region13
    $region12: #{memorization_forward.1} parent=1 // pred_region
      // Predicated region
      $region14: #{memorization_forward.1} parent=12 // pred_check
        _
      $region15: #{memorization_forward.1} parent=12 // pred_check_branch
        %63 = sbr.rel (0) target = $region17
      $region16: #{memorization_forward.1} parent=12 // pred_region
        // Predicated region
        $region18: #{memorization_forward.1} parent=16 // pred_check
          _
        $region19: #{memorization_forward.1} parent=16 // pred_check_branch
          %65 = sbr.rel target = $region21
        $region20: #{memorization_forward.1} parent=16 // pred_region
          // Predicated region
          $region33: #{memorization_forward.1} parent=20 // pred_check
            _
          $region34: #{memorization_forward.1} parent=20 // pred_check_branch
            %80 = sbr.rel (0) target = $region36
          $region35: #{memorization_forward.1} parent=20 // pred_region
            loop: start=0, step=1, limit=1
            $region37: #{memorization_forward.1} parent=35 // loop_pre_header
              _
            $region38: #{memorization_forward.1} parent=35 // loop_header
              %s83 = sphi 0, %s87
              %p84 = scmp.ge.s32.totalorder %s83, 1
              %s88 = sphi [#allocation2], [#allocation2]
              %s89 = sphi %s2, %s2
            $region39: #{memorization_forward.1} parent=35 // loop_header_branch
              %86 = sbr.rel (%p84) target = $region43
            $region40: #{memorization_forward.1} parent=35 // loop_body
              %v90 = vld [vmem:[%s88] sm:$0xf]
              %91 = vst [vmem:[%s89] sm:$0xf] %v90
            $region41: #{memorization_forward.1} parent=35 // loop_footer
              %s87 = sadd.s32 1, %s83
            $region42: #{memorization_forward.1} parent=35 // loop_footer_branch
              %82 = sbr.rel target = $region38
            $region43: #{memorization_forward.1} parent=35 // loop_exit
              _
          $region36: #{memorization_forward.1} parent=20 // pred_fallthru
            _
        $region21: #{memorization_forward.1} parent=16 // pred_fallthru
          _
        // Predicated region
        $region22: #{memorization_forward.1} parent=16 // pred_check
          _
        $region23: #{memorization_forward.1} parent=16 // pred_check_branch
          %67 = sbr.rel (0) target = $region25
        $region24: #{memorization_forward.1} parent=16 // pred_region
          loop: start=0, step=1, limit=1
          $region26: #{memorization_forward.1} parent=24 // loop_pre_header
            _
          $region27: #{memorization_forward.1} parent=24 // loop_header
            %s70 = sphi 0, %s74
            %p71 = scmp.ge.s32.totalorder %s70, 1
            %s75 = sphi [#allocation2], [#allocation2]
            %s76 = sphi %s2, %s2
          $region28: #{memorization_forward.1} parent=24 // loop_header_branch
            %73 = sbr.rel (%p71) target = $region32
          $region29: #{memorization_forward.1} parent=24 // loop_body
            %v77 = vld [vmem:[%s75] sm:$0xf]
            %78 = vst [vmem:[%s76] sm:$0xf] %v77
          $region30: #{memorization_forward.1} parent=24 // loop_footer
            %s74 = sadd.s32 1, %s70
          $region31: #{memorization_forward.1} parent=24 // loop_footer_branch
            %69 = sbr.rel target = $region27
          $region32: #{memorization_forward.1} parent=24 // loop_exit
            _
        $region25: #{memorization_forward.1} parent=16 // pred_fallthru
          _
      $region17: #{memorization_forward.1} parent=12 // pred_fallthru
        _
      %92 = vnop
    $region13: #{memorization_forward.1} parent=1 // pred_fallthru
      _
    // Predicated region
    $region44: #{memorization_forward.1} parent=1 // pred_check
      _
    $region45: #{memorization_forward.1} parent=1 // pred_check_branch
      %94 = sbr.rel (0) target = $region47
    $region46: #{memorization_forward.1} parent=1 // pred_region
      _
    $region47: #{memorization_forward.1} parent=1 // pred_fallthru
      _

</llo_original>
